<compile_context>
chip_gen: v7x
topology: tpu7x:2x2x1
jax: 0.10.0
libtpu: 0.0.40
codegen_flags: <defaults>
</compile_context>

<pallas_src>
import functools

import jax
import jax.numpy as jnp
from jax.experimental import pallas as pl
from jax.experimental.pallas import tpu as pltpu


def _round_up(n: int, m: int) -> int:
    return ((n + m - 1) // m) * m


def unembed_kernel(x_ref, w_ref, b_ref, o_ref):
    # x_ref: (tm, d_model) bf16 tile of the flattened residual stream
    # w_ref: (d_model, tn) bf16 vocab-column slice of W_U
    # b_ref: (1, tn)       f32 bias slice
    # o_ref: (tm, tn)      logits tile (out dtype)
    logits = jnp.dot(x_ref[...], w_ref[...], preferred_element_type=jnp.float32)
    o_ref[...] = (logits + b_ref[...]).astype(o_ref.dtype)


@functools.partial(jax.jit, static_argnames=("tm", "tn", "out_dtype"))
def unembed_forward(x, w_u, b_u, *, tm=2048, tn=1024, out_dtype=jnp.bfloat16):
    """x: [batch, posn, d_model] -> logits [batch, posn, d_vocab].

    Pass `w_u` pre-cast to bf16 (cast once, outside the hot path); f32 is
    accepted and cast here as a fallback.
    """
    batch, posn, d_model = x.shape
    d_vocab = w_u.shape[1]
    M = batch * posn

    # Effective, (8,128)-aligned tiles. tm is sized to hold the whole x slab
    # for typical prefill/decode shapes (=> W_U streamed exactly once); tn is
    # a multiple of 128, ragged vocab edge handled by masked edge blocks.
    tm_eff = min(tm, _round_up(M, 8))
    tn_eff = min(tn, _round_up(d_vocab, 128))
    n_m = pl.cdiv(M, tm_eff)
    n_v = pl.cdiv(d_vocab, tn_eff)

    x2d = x.reshape(M, d_model).astype(jnp.bfloat16)        # tiny, cheap cast
    w = w_u if w_u.dtype == jnp.bfloat16 else w_u.astype(jnp.bfloat16)
    b2d = b_u.astype(jnp.float32).reshape(1, d_vocab)

    out_size = jnp.dtype(out_dtype).itemsize
    # Double-buffered tiles + f32 matmul intermediate; cap at 56 MiB so the
    # request is valid on v7x (64 MiB VMEM/TC) as well as v5e/v6e (128 MiB).
    tile_bytes = (
        2 * tm_eff * d_model * 2        # x tile (bf16), double buffered
        + 2 * d_model * tn_eff * 2      # W_U tile (bf16), double buffered
        + 2 * tn_eff * 4                # bias tile (f32)
        + 2 * tm_eff * tn_eff * out_size  # output tile, double buffered
        + tm_eff * tn_eff * 4           # f32 matmul intermediate
    )
    vmem_limit = int(min(56 << 20, max(16 << 20, tile_bytes + (4 << 20))))

    # Rows are the inner grid axis, so the W tile's block index is constant
    # across inner steps and each W tile is DMA'd once. x is only re-streamed
    # when M exceeds tm (n_m > 1).
    x_reads = 1 if n_m == 1 else n_v
    cost = pl.CostEstimate(
        flops=2 * M * d_model * d_vocab,
        transcendentals=0,
        bytes_accessed=(
            x_reads * M * d_model * 2
            + d_model * d_vocab * 2
            + d_vocab * 4
            + M * d_vocab * out_size
        ),
    )

    out2d = pl.pallas_call(
        unembed_kernel,
        out_shape=jax.ShapeDtypeStruct((M, d_vocab), out_dtype),
        grid_spec=pltpu.PrefetchScalarGridSpec(
            num_scalar_prefetch=0,
            # vocab outer (parallel -> sharded across v7x TensorCores, so each
            # core reads a disjoint half of W_U), rows inner (W tile resident).
            grid=(n_v, n_m),
            in_specs=[
                pl.BlockSpec((tm_eff, d_model), lambda j, i: (i, 0)),  # x rows
                pl.BlockSpec((d_model, tn_eff), lambda j, i: (0, j)),  # W_U cols
                pl.BlockSpec((1, tn_eff), lambda j, i: (0, j)),        # b_U cols
            ],
            out_specs=pl.BlockSpec((tm_eff, tn_eff), lambda j, i: (i, j)),
        ),
        compiler_params=pltpu.CompilerParams(
            dimension_semantics=("parallel", "arbitrary"),
            vmem_limit_bytes=vmem_limit,
        ),
        cost_estimate=cost,
    )(x2d, w, b2d)

    # No padding was added, so this reshape is free (no slice, no copy).
    return out2d.reshape(batch, posn, d_vocab)


if __name__ == "__main__":
    # Small shapes consistent with the module's forward (same axis conventions
    # as cfg, scaled down): batch=2, posn=8, d_model=128, d_vocab=1000.
    # d_vocab=1000 exercises the ragged-vocab masked-edge path (real
    # cfg.d_vocab=50257 is also not a multiple of 128).
    batch, posn, d_model, d_vocab = 2, 8, 128, 1000
    init_range = 0.02

    key = jax.random.PRNGKey(0)
    kx, kw, kb = jax.random.split(key, 3)

    x = jax.random.normal(kx, (batch, posn, d_model), dtype=jnp.float32)
    w_u = init_range * jax.random.normal(kw, (d_model, d_vocab), dtype=jnp.float32)
    # Module init is zeros; use a small nonzero bias here so the add path is
    # actually verified (forward semantics are identical).
    b_u = 0.01 * jax.random.normal(kb, (d_vocab,), dtype=jnp.float32)

    # Hoisted one-time cast of the unembedding matrix (per perf review the
    # per-call f32->bf16 cast of the ~154 MB W_U was pure wasted bandwidth).
    w_u_bf16 = jax.block_until_ready(w_u.astype(jnp.bfloat16))

    out = unembed_forward(x, w_u_bf16, b_u)
    out = jax.block_until_ready(out)

    # Pure-JAX reference (same math as the PyTorch forward, f32).
    ref = jnp.einsum("bpd,dv->bpv", x, w_u) + b_u

    assert out.shape == (batch, posn, d_vocab)
    # Loose tolerance: bf16 MXU operands + bf16 logits (f32 accumulation).
    assert jnp.allclose(out.astype(jnp.float32), ref, atol=2e-2, rtol=2e-2), float(
        jnp.max(jnp.abs(out.astype(jnp.float32) - ref))
    )

    print("KERNEL_OK")
</pallas_src>

<mosaic_0001>
module attributes {stable_mosaic.version = 11 : i64} {
  func.func @unembed_kernel(%arg0: i32, %arg1: i32, %arg2: memref<16x128xbf16, #tpu.memory_space<vmem>>, %arg3: memref<128x1024xbf16, #tpu.memory_space<vmem>>, %arg4: memref<1x1024xf32, #tpu.memory_space<vmem>>, %arg5: memref<16x1024xbf16, #tpu.memory_space<vmem>>) attributes {dimension_semantics = [#tpu.dimension_semantics<parallel>, #tpu.dimension_semantics<arbitrary>], iteration_bounds = array<i64: 1, 1>, scalar_prefetch = 0 : i64, scratch_operands = 0 : i64, tpu.core_type = #tpu.core_type<tc>, window_params = [{transform_indices = @transform_0, window_bounds = array<i64: 16, 128>}, {transform_indices = @transform_1, window_bounds = array<i64: 128, 1024>}, {transform_indices = @transform_2, window_bounds = array<i64: 1, 1024>}, {transform_indices = @transform_3, window_bounds = array<i64: 16, 1024>}]} {
    %c0 = arith.constant 0 : index
    %c0_0 = arith.constant 0 : index
    %0 = vector.load %arg2[%c0, %c0_0] : memref<16x128xbf16, #tpu.memory_space<vmem>>, vector<16x128xbf16>
    %c0_1 = arith.constant 0 : index
    %c0_2 = arith.constant 0 : index
    %1 = vector.load %arg3[%c0_1, %c0_2] : memref<128x1024xbf16, #tpu.memory_space<vmem>>, vector<128x1024xbf16>
    %cst = arith.constant dense<0.000000e+00> : vector<16x1024xf32>
    %2 = tpu.matmul %0, %1, %cst {dimension_numbers = #tpu.dot_dimension_numbers<[1], [0], [0], [1], [0, 0, 1, 1], [], []>} : vector<16x128xbf16>, vector<128x1024xbf16>, vector<16x1024xf32> -> vector<16x1024xf32>
    %c0_3 = arith.constant 0 : index
    %c0_4 = arith.constant 0 : index
    %3 = vector.load %arg4[%c0_3, %c0_4] : memref<1x1024xf32, #tpu.memory_space<vmem>>, vector<1x1024xf32>
    %4 = vector.broadcast %3 : vector<1x1024xf32> to vector<16x1024xf32>
    %5 = arith.addf %2, %4 : vector<16x1024xf32>
    %6 = arith.truncf %5 : vector<16x1024xf32> to vector<16x1024xbf16>
    %c0_5 = arith.constant 0 : index
    %c0_6 = arith.constant 0 : index
    %7 = vector.load %arg5[%c0_5, %c0_6] : memref<16x1024xbf16, #tpu.memory_space<vmem>>, vector<16x1024xbf16>
    tpu.vector_store %arg5[%c0_5, %c0_6], %6 {strides = array<i32>} : memref<16x1024xbf16, #tpu.memory_space<vmem>>, vector<16x1024xbf16>,
    return
  }
  func.func @transform_0(%arg0: i32, %arg1: i32) -> (i32, i32) {
    %c0_i32 = arith.constant 0 : i32
    %c0_i32_0 = arith.constant 0 : i32
    return %arg1, %c0_i32 : i32, i32
  }
  func.func @transform_1(%arg0: i32, %arg1: i32) -> (i32, i32) {
    %c0_i32 = arith.constant 0 : i32
    %c0_i32_0 = arith.constant 0 : i32
    return %c0_i32, %arg0 : i32, i32
  }
  func.func @transform_2(%arg0: i32, %arg1: i32) -> (i32, i32) {
    %c0_i32 = arith.constant 0 : i32
    %c0_i32_0 = arith.constant 0 : i32
    return %c0_i32, %arg0 : i32, i32
  }
  func.func @transform_3(%arg0: i32, %arg1: i32) -> (i32, i32) {
    %c0_i32 = arith.constant 0 : i32
    return %arg1, %arg0 : i32, i32
  }
}

</mosaic_0001>

<llo_original>
// kernel: unembed_forward.1
$region0: #{unembed_forward.1}
  #allocation0 [shape = 'u32[]', space=smem, size = 0x4, offset = 0x4, fixed_abs, tag = 'smem constant byte address 0x4 - core index']
  #allocation1 [shape = 'u32[144,128]{1,0:T(1,128)}', space=vmem, size = 0x12000, scoped, tag = 'internal scratch']
  %s0 = inlined_call_operand.vmem [shape: bf16[16,128], index: 0, kind: input, shape index: {}]
  %s1 = inlined_call_operand.vmem [shape: bf16[128,1000], index: 1, kind: input, shape index: {}]
  %s2 = inlined_call_operand.vmem [shape: f32[1,1000], index: 2, kind: input, shape index: {}]
  %s3 = inlined_call_operand.hbm [shape: bf16[16,1000], index: 3, kind: output, shape index: {}]
  %s4 = sld [smem:[#allocation0]]
  $region22: #{unembed_forward.1} parent=0
    _
  %s6 = ssub.s32 1, %s4
  %s7 = scalar_select 0, %s6, %s4
  $region1: #{unembed_forward.1} parent=0
    #allocation2 [shape = 'u8[32768]{0}', space=vmem, size = 0x8000, scoped, tag = 'output window, operand 0, single buffered']
    #allocation3 [shape = 's32[1]{0}', space=sflag, size = 0x4, scoped, tag = 'scoped memory for unembed_forward.1']
    %8 = vsyncpa [#allocation3], 0
    // Predicated region
    $region2: #{unembed_forward.1} parent=1 // pred_check
      _
    $region3: #{unembed_forward.1} parent=1 // pred_check_branch
      %10 = sbr.rel (0) target = $region5
    $region4: #{unembed_forward.1} parent=1 // pred_region
      _
    $region5: #{unembed_forward.1} parent=1 // pred_fallthru
      _
    // Predicated region
    $region6: #{unembed_forward.1} parent=1 // pred_check
      _
    $region7: #{unembed_forward.1} parent=1 // pred_check_branch
      %12 = sbr.rel (0) target = $region9
    $region8: #{unembed_forward.1} parent=1 // pred_region
      _
    $region9: #{unembed_forward.1} parent=1 // pred_fallthru
      _
    // Predicated region
    $region10: #{unembed_forward.1} parent=1 // pred_check
      _
    $region11: #{unembed_forward.1} parent=1 // pred_check_branch
      %14 = sbr.rel (0) target = $region13
    $region12: #{unembed_forward.1} parent=1 // pred_region
      _
    $region13: #{unembed_forward.1} parent=1 // pred_fallthru
      _
    %v16 = vld [vmem:[%s0] sm:$0xf]
    %v17 = vld [vmem:[%s0 + $0x4] sm:$0xf]
    %v18 = vld [vmem:[%s1] sm:$0xff]
    %v19 = vld [vmem:[%s1 + $0x8] sm:$0xff]
    %v20 = vld [vmem:[%s1 + $0x10] sm:$0xff]
    %v21 = vld [vmem:[%s1 + $0x18] sm:$0xff]
    %v22 = vld [vmem:[%s1 + $0x20] sm:$0xff]
    %v23 = vld [vmem:[%s1 + $0x28] sm:$0xff]
    %v24 = vld [vmem:[%s1 + $0x30] sm:$0xff]
    %v25 = vld [vmem:[%s1 + $0x38] sm:$0xff]
    %v26 = vld [vmem:[%s1 + $0x40] sm:$0xff]
    %v27 = vld [vmem:[%s1 + $0x48] sm:$0xff]
    %v28 = vld [vmem:[%s1 + $0x50] sm:$0xff]
    %v29 = vld [vmem:[%s1 + $0x58] sm:$0xff]
    %v30 = vld [vmem:[%s1 + $0x60] sm:$0xff]
    %v31 = vld [vmem:[%s1 + $0x68] sm:$0xff]
    %v32 = vld [vmem:[%s1 + $0x70] sm:$0xff]
    %v33 = vld [vmem:[%s1 + $0x78] sm:$0xff]
    %v34 = vld [vmem:[%s1 + $0x80] sm:$0xff]
    %v35 = vld [vmem:[%s1 + $0x88] sm:$0xff]
    %v36 = vld [vmem:[%s1 + $0x90] sm:$0xff]
    %v37 = vld [vmem:[%s1 + $0x98] sm:$0xff]
    %v38 = vld [vmem:[%s1 + $0xa0] sm:$0xff]
    %v39 = vld [vmem:[%s1 + $0xa8] sm:$0xff]
    %v40 = vld [vmem:[%s1 + $0xb0] sm:$0xff]
    %v41 = vld [vmem:[%s1 + $0xb8] sm:$0xff]
    %v42 = vld [vmem:[%s1 + $0xc0] sm:$0xff]
    %v43 = vld [vmem:[%s1 + $0xc8] sm:$0xff]
    %v44 = vld [vmem:[%s1 + $0xd0] sm:$0xff]
    %v45 = vld [vmem:[%s1 + $0xd8] sm:$0xff]
    %v46 = vld [vmem:[%s1 + $0xe0] sm:$0xff]
    %v47 = vld [vmem:[%s1 + $0xe8] sm:$0xff]
    %v48 = vld [vmem:[%s1 + $0xf0] sm:$0xff]
    %v49 = vld [vmem:[%s1 + $0xf8] sm:$0xff]
    %v50 = vld [vmem:[%s1 + $0x100] sm:$0xff]
    %v51 = vld [vmem:[%s1 + $0x108] sm:$0xff]
    %v52 = vld [vmem:[%s1 + $0x110] sm:$0xff]
    %v53 = vld [vmem:[%s1 + $0x118] sm:$0xff]
    %v54 = vld [vmem:[%s1 + $0x120] sm:$0xff]
    %v55 = vld [vmem:[%s1 + $0x128] sm:$0xff]
    %v56 = vld [vmem:[%s1 + $0x130] sm:$0xff]
    %v57 = vld [vmem:[%s1 + $0x138] sm:$0xff]
    %v58 = vld [vmem:[%s1 + $0x140] sm:$0xff]
    %v59 = vld [vmem:[%s1 + $0x148] sm:$0xff]
    %v60 = vld [vmem:[%s1 + $0x150] sm:$0xff]
    %v61 = vld [vmem:[%s1 + $0x158] sm:$0xff]
    %v62 = vld [vmem:[%s1 + $0x160] sm:$0xff]
    %v63 = vld [vmem:[%s1 + $0x168] sm:$0xff]
    %v64 = vld [vmem:[%s1 + $0x170] sm:$0xff]
    %v65 = vld [vmem:[%s1 + $0x178] sm:$0xff]
    %v66 = vld [vmem:[%s1 + $0x180] sm:$0xff]
    %v67 = vld [vmem:[%s1 + $0x188] sm:$0xff]
    %v68 = vld [vmem:[%s1 + $0x190] sm:$0xff]
    %v69 = vld [vmem:[%s1 + $0x198] sm:$0xff]
    %v70 = vld [vmem:[%s1 + $0x1a0] sm:$0xff]
    %v71 = vld [vmem:[%s1 + $0x1a8] sm:$0xff]
    %v72 = vld [vmem:[%s1 + $0x1b0] sm:$0xff]
    %v73 = vld [vmem:[%s1 + $0x1b8] sm:$0xff]
    %v74 = vld [vmem:[%s1 + $0x1c0] sm:$0xff]
    %v75 = vld [vmem:[%s1 + $0x1c8] sm:$0xff]
    %v76 = vld [vmem:[%s1 + $0x1d0] sm:$0xff]
    %v77 = vld [vmem:[%s1 + $0x1d8] sm:$0xff]
    %v78 = vld [vmem:[%s1 + $0x1e0] sm:$0xff]
    %v79 = vld [vmem:[%s1 + $0x1e8] sm:$0xff]
    %v80 = vld [vmem:[%s1 + $0x1f0] sm:$0xff]
    %v81 = vld [vmem:[%s1 + $0x1f8] sm:$0xff]
    %v82 = vld [vmem:[%s2] sm:$0xff]
    %v84 = vlaneseq
    %v85 = vshrl.u32 %v84, 7
    %v86 = vsub.s32 0, %v85
    %v87 = vrot.slane %v82, %v86
    %v88 = vlaneseq
    %v89 = vshrl.u32 %v88, 7
    %v90 = vsub.s32 1, %v89
    %v91 = vrot.slane %v82, %v90
    %v92 = vlaneseq
    %v93 = vshrl.u32 %v92, 7
    %v94 = vsub.s32 2, %v93
    %v95 = vrot.slane %v82, %v94
    %v96 = vlaneseq
    %v97 = vshrl.u32 %v96, 7
    %v98 = vsub.s32 3, %v97
    %v99 = vrot.slane %v82, %v98
    %v100 = vlaneseq
    %v101 = vshrl.u32 %v100, 7
    %v102 = vsub.s32 4, %v101
    %v103 = vrot.slane %v82, %v102
    %v104 = vlaneseq
    %v105 = vshrl.u32 %v104, 7
    %v106 = vsub.s32 5, %v105
    %v107 = vrot.slane %v82, %v106
    %v108 = vlaneseq
    %v109 = vshrl.u32 %v108, 7
    %v110 = vsub.s32 6, %v109
    %v111 = vrot.slane %v82, %v110
    %v112 = vlaneseq
    %v113 = vshrl.u32 %v112, 7
    %v114 = vsub.s32 7, %v113
    %v115 = vrot.slane %v82, %v114
    %v126 = vunpack.c.l.b16 %v16
    %v127 = vunpack.c.l.b16 %v17
    %v128 = vpack.c.b16 %v127, %v126
    %v194 = vunpack.c.l.b16 %v18
    %v195 = vunpack.c.h.b16 %v18
    %v196 = vunpack.c.l.b16 %v19
    %v197 = vunpack.c.h.b16 %v19
    %v198 = vunpack.c.l.b16 %v20
    %v199 = vunpack.c.h.b16 %v20
    %v200 = vunpack.c.l.b16 %v21
    %v201 = vunpack.c.h.b16 %v21
    %v202 = vunpack.c.l.b16 %v22
    %v203 = vunpack.c.h.b16 %v22
    %v204 = vunpack.c.l.b16 %v23
    %v205 = vunpack.c.h.b16 %v23
    %v206 = vunpack.c.l.b16 %v24
    %v207 = vunpack.c.h.b16 %v24
    %v208 = vunpack.c.l.b16 %v25
    %v209 = vunpack.c.h.b16 %v25
    %v210 = vunpack.c.l.b16 %v26
    %v211 = vunpack.c.h.b16 %v26
    %v212 = vunpack.c.l.b16 %v27
    %v213 = vunpack.c.h.b16 %v27
    %v214 = vunpack.c.l.b16 %v28
    %v215 = vunpack.c.h.b16 %v28
    %v216 = vunpack.c.l.b16 %v29
    %v217 = vunpack.c.h.b16 %v29
    %v218 = vunpack.c.l.b16 %v30
    %v219 = vunpack.c.h.b16 %v30
    %v220 = vunpack.c.l.b16 %v31
    %v221 = vunpack.c.h.b16 %v31
    %v222 = vunpack.c.l.b16 %v32
    %v223 = vunpack.c.h.b16 %v32
    %v224 = vunpack.c.l.b16 %v33
    %v225 = vunpack.c.h.b16 %v33
    %v226 = vunpack.c.l.b16 %v34
    %v227 = vunpack.c.h.b16 %v34
    %v228 = vunpack.c.l.b16 %v35
    %v229 = vunpack.c.h.b16 %v35
    %v230 = vunpack.c.l.b16 %v36
    %v231 = vunpack.c.h.b16 %v36
    %v232 = vunpack.c.l.b16 %v37
    %v233 = vunpack.c.h.b16 %v37
    %v234 = vunpack.c.l.b16 %v38
    %v235 = vunpack.c.h.b16 %v38
    %v236 = vunpack.c.l.b16 %v39
    %v237 = vunpack.c.h.b16 %v39
    %v238 = vunpack.c.l.b16 %v40
    %v239 = vunpack.c.h.b16 %v40
    %v240 = vunpack.c.l.b16 %v41
    %v241 = vunpack.c.h.b16 %v41
    %v242 = vunpack.c.l.b16 %v42
    %v243 = vunpack.c.h.b16 %v42
    %v244 = vunpack.c.l.b16 %v43
    %v245 = vunpack.c.h.b16 %v43
    %v246 = vunpack.c.l.b16 %v44
    %v247 = vunpack.c.h.b16 %v44
    %v248 = vunpack.c.l.b16 %v45
    %v249 = vunpack.c.h.b16 %v45
    %v250 = vunpack.c.l.b16 %v46
    %v251 = vunpack.c.h.b16 %v46
    %v252 = vunpack.c.l.b16 %v47
    %v253 = vunpack.c.h.b16 %v47
    %v254 = vunpack.c.l.b16 %v48
    %v255 = vunpack.c.h.b16 %v48
    %v256 = vunpack.c.l.b16 %v49
    %v257 = vunpack.c.h.b16 %v49
    %v258 = vunpack.c.l.b16 %v50
    %v259 = vunpack.c.h.b16 %v50
    %v260 = vunpack.c.l.b16 %v51
    %v261 = vunpack.c.h.b16 %v51
    %v262 = vunpack.c.l.b16 %v52
    %v263 = vunpack.c.h.b16 %v52
    %v264 = vunpack.c.l.b16 %v53
    %v265 = vunpack.c.h.b16 %v53
    %v266 = vunpack.c.l.b16 %v54
    %v267 = vunpack.c.h.b16 %v54
    %v268 = vunpack.c.l.b16 %v55
    %v269 = vunpack.c.h.b16 %v55
    %v270 = vunpack.c.l.b16 %v56
    %v271 = vunpack.c.h.b16 %v56
    %v272 = vunpack.c.l.b16 %v57
    %v273 = vunpack.c.h.b16 %v57
    %v274 = vunpack.c.l.b16 %v58
    %v275 = vunpack.c.h.b16 %v58
    %v276 = vunpack.c.l.b16 %v59
    %v277 = vunpack.c.h.b16 %v59
    %v278 = vunpack.c.l.b16 %v60
    %v279 = vunpack.c.h.b16 %v60
    %v280 = vunpack.c.l.b16 %v61
    %v281 = vunpack.c.h.b16 %v61
    %v282 = vunpack.c.l.b16 %v62
    %v283 = vunpack.c.h.b16 %v62
    %v284 = vunpack.c.l.b16 %v63
    %v285 = vunpack.c.h.b16 %v63
    %v286 = vunpack.c.l.b16 %v64
    %v287 = vunpack.c.h.b16 %v64
    %v288 = vunpack.c.l.b16 %v65
    %v289 = vunpack.c.h.b16 %v65
    %v290 = vunpack.c.l.b16 %v66
    %v291 = vunpack.c.h.b16 %v66
    %v292 = vunpack.c.l.b16 %v67
    %v293 = vunpack.c.h.b16 %v67
    %v294 = vunpack.c.l.b16 %v68
    %v295 = vunpack.c.h.b16 %v68
    %v296 = vunpack.c.l.b16 %v69
    %v297 = vunpack.c.h.b16 %v69
    %v298 = vunpack.c.l.b16 %v70
    %v299 = vunpack.c.h.b16 %v70
    %v300 = vunpack.c.l.b16 %v71
    %v301 = vunpack.c.h.b16 %v71
    %v302 = vunpack.c.l.b16 %v72
    %v303 = vunpack.c.h.b16 %v72
    %v304 = vunpack.c.l.b16 %v73
    %v305 = vunpack.c.h.b16 %v73
    %v306 = vunpack.c.l.b16 %v74
    %v307 = vunpack.c.h.b16 %v74
    %v308 = vunpack.c.l.b16 %v75
    %v309 = vunpack.c.h.b16 %v75
    %v310 = vunpack.c.l.b16 %v76
    %v311 = vunpack.c.h.b16 %v76
    %v312 = vunpack.c.l.b16 %v77
    %v313 = vunpack.c.h.b16 %v77
    %v314 = vunpack.c.l.b16 %v78
    %v315 = vunpack.c.h.b16 %v78
    %v316 = vunpack.c.l.b16 %v79
    %v317 = vunpack.c.h.b16 %v79
    %v318 = vunpack.c.l.b16 %v80
    %v319 = vunpack.c.h.b16 %v80
    %v320 = vunpack.c.l.b16 %v81
    %v321 = vunpack.c.h.b16 %v81
    %v322 = vpack.c.b16 %v202, %v194
    %v323 = vpack.c.b16 %v203, %v195
    %v324 = vpack.c.b16 %v204, %v196
    %v325 = vpack.c.b16 %v205, %v197
    %v326 = vpack.c.b16 %v206, %v198
    %v327 = vpack.c.b16 %v207, %v199
    %v328 = vpack.c.b16 %v208, %v200
    %v329 = vpack.c.b16 %v209, %v201
    %v330 = vpack.c.b16 %v218, %v210
    %v331 = vpack.c.b16 %v219, %v211
    %v332 = vpack.c.b16 %v220, %v212
    %v333 = vpack.c.b16 %v221, %v213
    %v334 = vpack.c.b16 %v222, %v214
    %v335 = vpack.c.b16 %v223, %v215
    %v336 = vpack.c.b16 %v224, %v216
    %v337 = vpack.c.b16 %v225, %v217
    %v338 = vpack.c.b16 %v234, %v226
    %v339 = vpack.c.b16 %v235, %v227
    %v340 = vpack.c.b16 %v236, %v228
    %v341 = vpack.c.b16 %v237, %v229
    %v342 = vpack.c.b16 %v238, %v230
    %v343 = vpack.c.b16 %v239, %v231
    %v344 = vpack.c.b16 %v240, %v232
    %v345 = vpack.c.b16 %v241, %v233
    %v346 = vpack.c.b16 %v250, %v242
    %v347 = vpack.c.b16 %v251, %v243
    %v348 = vpack.c.b16 %v252, %v244
    %v349 = vpack.c.b16 %v253, %v245
    %v350 = vpack.c.b16 %v254, %v246
    %v351 = vpack.c.b16 %v255, %v247
    %v352 = vpack.c.b16 %v256, %v248
    %v353 = vpack.c.b16 %v257, %v249
    %v354 = vpack.c.b16 %v266, %v258
    %v355 = vpack.c.b16 %v267, %v259
    %v356 = vpack.c.b16 %v268, %v260
    %v357 = vpack.c.b16 %v269, %v261
    %v358 = vpack.c.b16 %v270, %v262
    %v359 = vpack.c.b16 %v271, %v263
    %v360 = vpack.c.b16 %v272, %v264
    %v361 = vpack.c.b16 %v273, %v265
    %v362 = vpack.c.b16 %v282, %v274
    %v363 = vpack.c.b16 %v283, %v275
    %v364 = vpack.c.b16 %v284, %v276
    %v365 = vpack.c.b16 %v285, %v277
    %v366 = vpack.c.b16 %v286, %v278
    %v367 = vpack.c.b16 %v287, %v279
    %v368 = vpack.c.b16 %v288, %v280
    %v369 = vpack.c.b16 %v289, %v281
    %v370 = vpack.c.b16 %v298, %v290
    %v371 = vpack.c.b16 %v299, %v291
    %v372 = vpack.c.b16 %v300, %v292
    %v373 = vpack.c.b16 %v301, %v293
    %v374 = vpack.c.b16 %v302, %v294
    %v375 = vpack.c.b16 %v303, %v295
    %v376 = vpack.c.b16 %v304, %v296
    %v377 = vpack.c.b16 %v305, %v297
    %v378 = vpack.c.b16 %v314, %v306
    %v379 = vpack.c.b16 %v315, %v307
    %v380 = vpack.c.b16 %v316, %v308
    %v381 = vpack.c.b16 %v317, %v309
    %v382 = vpack.c.b16 %v318, %v310
    %v383 = vpack.c.b16 %v319, %v311
    %v384 = vpack.c.b16 %v320, %v312
    %v385 = vpack.c.b16 %v321, %v313
    %450 = vmatprep.subr.bf16.mxu0 %v323
    %451 = vmatpush1.bf16.msra.mxu0 %v322
    %452 = vmatprep.subr.bf16.mxu0 %v331
    %453 = vmatpush1.bf16.msra.mxu0 %v330
    %454 = vmatprep.subr.bf16.mxu0 %v339
    %455 = vmatpush1.bf16.msra.mxu0 %v338
    %456 = vmatprep.subr.bf16.mxu0 %v347
    %457 = vmatpush1.bf16.msra.mxu0 %v346
    %458 = vmatprep.subr.bf16.mxu0 %v355
    %459 = vmatpush1.bf16.msra.mxu0 %v354
    %460 = vmatprep.subr.bf16.mxu0 %v363
    %461 = vmatpush1.bf16.msra.mxu0 %v362
    %462 = vmatprep.subr.bf16.mxu0 %v371
    %463 = vmatpush1.bf16.msra.mxu0 %v370
    %464 = vmatprep.subr.bf16.mxu0 %v379
    %465 = vmatpush1.bf16.msra.mxu0 %v378
    %466 = vmatprep.subr.bf16.mxu0 0
    %467 = vmatpush1.bf16.msra.mxu0 0
    %468 = vmatprep.subr.bf16.mxu0 0
    %469 = vmatpush1.bf16.msra.mxu0 0
    %470 = vmatprep.subr.bf16.mxu0 0
    %471 = vmatpush1.bf16.msra.mxu0 0
    %472 = vmatprep.subr.bf16.mxu0 0
    %473 = vmatpush1.bf16.msra.mxu0 0
    %474 = vmatprep.subr.bf16.mxu0 0
    %475 = vmatpush1.bf16.msra.mxu0 0
    %476 = vmatprep.subr.bf16.mxu0 0
    %477 = vmatpush1.bf16.msra.mxu0 0
    %478 = vmatprep.subr.bf16.mxu0 0
    %479 = vmatpush1.bf16.msra.mxu0 0
    %480 = vmatprep.subr.bf16.mxu0 0
    %481 = vmatpush1.bf16.msra.mxu0 0
    %482 = vmatprep.mubr.bf16.mxu0 0
    %483 = vmatmul.mubr.bf16.gmra.mrb[0].mxu0 %v128
    %v484 = vpop.f32.mrb[0].mxu0
    %v485 = vadd.f32 %v87, %v484
    %v486 = vpop.f32.mrb[0].mxu0
    %v487 = vadd.f32 %v91, %v486
    %v488 = vpop.f32.mrb[0].mxu0
    %v489 = vadd.f32 %v87, %v488
    %v490 = vpop.f32.mrb[0].mxu0
    %v491 = vadd.f32 %v91, %v490
    %492 = vdwg.mxu0
    %493 = vmatprep.subr.bf16.mxu0 %v325
    %494 = vmatpush1.bf16.msra.mxu0 %v324
    %495 = vmatprep.subr.bf16.mxu0 %v333
    %496 = vmatpush1.bf16.msra.mxu0 %v332
    %497 = vmatprep.subr.bf16.mxu0 %v341
    %498 = vmatpush1.bf16.msra.mxu0 %v340
    %499 = vmatprep.subr.bf16.mxu0 %v349
    %500 = vmatpush1.bf16.msra.mxu0 %v348
    %501 = vmatprep.subr.bf16.mxu0 %v357
    %502 = vmatpush1.bf16.msra.mxu0 %v356
    %503 = vmatprep.subr.bf16.mxu0 %v365
    %504 = vmatpush1.bf16.msra.mxu0 %v364
    %505 = vmatprep.subr.bf16.mxu0 %v373
    %506 = vmatpush1.bf16.msra.mxu0 %v372
    %507 = vmatprep.subr.bf16.mxu0 %v381
    %508 = vmatpush1.bf16.msra.mxu0 %v380
    %509 = vmatprep.subr.bf16.mxu0 0
    %510 = vmatpush1.bf16.msra.mxu0 0
    %511 = vmatprep.subr.bf16.mxu0 0
    %512 = vmatpush1.bf16.msra.mxu0 0
    %513 = vmatprep.subr.bf16.mxu0 0
    %514 = vmatpush1.bf16.msra.mxu0 0
    %515 = vmatprep.subr.bf16.mxu0 0
    %516 = vmatpush1.bf16.msra.mxu0 0
    %517 = vmatprep.subr.bf16.mxu0 0
    %518 = vmatpush1.bf16.msra.mxu0 0
    %519 = vmatprep.subr.bf16.mxu0 0
    %520 = vmatpush1.bf16.msra.mxu0 0
    %521 = vmatprep.subr.bf16.mxu0 0
    %522 = vmatpush1.bf16.msra.mxu0 0
    %523 = vmatprep.subr.bf16.mxu0 0
    %524 = vmatpush1.bf16.msra.mxu0 0
    %525 = vmatprep.mubr.bf16.mxu0 0
    %526 = vmatmul.mubr.bf16.gmra.mrb[0].mxu0 %v128
    %v527 = vpop.f32.mrb[0].mxu0
    %v528 = vadd.f32 %v95, %v527
    %v529 = vpop.f32.mrb[0].mxu0
    %v530 = vadd.f32 %v99, %v529
    %v531 = vpop.f32.mrb[0].mxu0
    %v532 = vadd.f32 %v95, %v531
    %v533 = vpop.f32.mrb[0].mxu0
    %v534 = vadd.f32 %v99, %v533
    %535 = vdwg.mxu0
    %536 = vmatprep.subr.bf16.mxu0 %v327
    %537 = vmatpush1.bf16.msra.mxu0 %v326
    %538 = vmatprep.subr.bf16.mxu0 %v335
    %539 = vmatpush1.bf16.msra.mxu0 %v334
    %540 = vmatprep.subr.bf16.mxu0 %v343
    %541 = vmatpush1.bf16.msra.mxu0 %v342
    %542 = vmatprep.subr.bf16.mxu0 %v351
    %543 = vmatpush1.bf16.msra.mxu0 %v350
    %544 = vmatprep.subr.bf16.mxu0 %v359
    %545 = vmatpush1.bf16.msra.mxu0 %v358
    %546 = vmatprep.subr.bf16.mxu0 %v367
    %547 = vmatpush1.bf16.msra.mxu0 %v366
    %548 = vmatprep.subr.bf16.mxu0 %v375
    %549 = vmatpush1.bf16.msra.mxu0 %v374
    %550 = vmatprep.subr.bf16.mxu0 %v383
    %551 = vmatpush1.bf16.msra.mxu0 %v382
    %552 = vmatprep.subr.bf16.mxu0 0
    %553 = vmatpush1.bf16.msra.mxu0 0
    %554 = vmatprep.subr.bf16.mxu0 0
    %555 = vmatpush1.bf16.msra.mxu0 0
    %556 = vmatprep.subr.bf16.mxu0 0
    %557 = vmatpush1.bf16.msra.mxu0 0
    %558 = vmatprep.subr.bf16.mxu0 0
    %559 = vmatpush1.bf16.msra.mxu0 0
    %560 = vmatprep.subr.bf16.mxu0 0
    %561 = vmatpush1.bf16.msra.mxu0 0
    %562 = vmatprep.subr.bf16.mxu0 0
    %563 = vmatpush1.bf16.msra.mxu0 0
    %564 = vmatprep.subr.bf16.mxu0 0
    %565 = vmatpush1.bf16.msra.mxu0 0
    %566 = vmatprep.subr.bf16.mxu0 0
    %567 = vmatpush1.bf16.msra.mxu0 0
    %568 = vmatprep.mubr.bf16.mxu0 0
    %569 = vmatmul.mubr.bf16.gmra.mrb[0].mxu0 %v128
    %v570 = vpop.f32.mrb[0].mxu0
    %v571 = vadd.f32 %v103, %v570
    %v572 = vpop.f32.mrb[0].mxu0
    %v573 = vadd.f32 %v107, %v572
    %v574 = vpop.f32.mrb[0].mxu0
    %v575 = vadd.f32 %v103, %v574
    %v576 = vpop.f32.mrb[0].mxu0
    %v577 = vadd.f32 %v107, %v576
    %578 = vdwg.mxu0
    %579 = vmatprep.subr.bf16.mxu0 %v329
    %580 = vmatpush1.bf16.msra.mxu0 %v328
    %581 = vmatprep.subr.bf16.mxu0 %v337
    %582 = vmatpush1.bf16.msra.mxu0 %v336
    %583 = vmatprep.subr.bf16.mxu0 %v345
    %584 = vmatpush1.bf16.msra.mxu0 %v344
    %585 = vmatprep.subr.bf16.mxu0 %v353
    %586 = vmatpush1.bf16.msra.mxu0 %v352
    %587 = vmatprep.subr.bf16.mxu0 %v361
    %588 = vmatpush1.bf16.msra.mxu0 %v360
    %589 = vmatprep.subr.bf16.mxu0 %v369
    %590 = vmatpush1.bf16.msra.mxu0 %v368
    %591 = vmatprep.subr.bf16.mxu0 %v377
    %592 = vmatpush1.bf16.msra.mxu0 %v376
    %593 = vmatprep.subr.bf16.mxu0 %v385
    %594 = vmatpush1.bf16.msra.mxu0 %v384
    %595 = vmatprep.subr.bf16.mxu0 0
    %596 = vmatpush1.bf16.msra.mxu0 0
    %597 = vmatprep.subr.bf16.mxu0 0
    %598 = vmatpush1.bf16.msra.mxu0 0
    %599 = vmatprep.subr.bf16.mxu0 0
    %600 = vmatpush1.bf16.msra.mxu0 0
    %601 = vmatprep.subr.bf16.mxu0 0
    %602 = vmatpush1.bf16.msra.mxu0 0
    %603 = vmatprep.subr.bf16.mxu0 0
    %604 = vmatpush1.bf16.msra.mxu0 0
    %605 = vmatprep.subr.bf16.mxu0 0
    %606 = vmatpush1.bf16.msra.mxu0 0
    %607 = vmatprep.subr.bf16.mxu0 0
    %608 = vmatpush1.bf16.msra.mxu0 0
    %609 = vmatprep.subr.bf16.mxu0 0
    %610 = vmatpush1.bf16.msra.mxu0 0
    %611 = vmatprep.mubr.bf16.mxu0 0
    %612 = vmatmul.mubr.bf16.gmra.mrb[0].mxu0 %v128
    %v613 = vpop.f32.mrb[0].mxu0
    %v614 = vadd.f32 %v111, %v613
    %v615 = vpop.f32.mrb[0].mxu0
    %v616 = vadd.f32 %v115, %v615
    %v617 = vpop.f32.mrb[0].mxu0
    %v618 = vadd.f32 %v111, %v617
    %v619 = vpop.f32.mrb[0].mxu0
    %v620 = vadd.f32 %v115, %v619
    %621 = vdwg.mxu0
    %v622 = vpack.c.bf16 %v489, %v485
    %v623 = vpack.c.bf16 %v491, %v487
    %v624 = vpack.c.bf16 %v532, %v528
    %v625 = vpack.c.bf16 %v534, %v530
    %v626 = vpack.c.bf16 %v575, %v571
    %v627 = vpack.c.bf16 %v577, %v573
    %v628 = vpack.c.bf16 %v618, %v614
    %v629 = vpack.c.bf16 %v620, %v616
    %v638 = vunpack.c.l.b16 %v622
    %v639 = vunpack.c.l.b16 %v623
    %v640 = vunpack.c.l.b16 %v624
    %v641 = vunpack.c.l.b16 %v625
    %v642 = vunpack.c.l.b16 %v626
    %v643 = vunpack.c.l.b16 %v627
    %v644 = vunpack.c.l.b16 %v628
    %v645 = vunpack.c.l.b16 %v629
    %v646 = vunpack.c.h.b16 %v622
    %v647 = vunpack.c.h.b16 %v623
    %v648 = vunpack.c.h.b16 %v624
    %v649 = vunpack.c.h.b16 %v625
    %v650 = vunpack.c.h.b16 %v626
    %v651 = vunpack.c.h.b16 %v627
    %v652 = vunpack.c.h.b16 %v628
    %v653 = vunpack.c.h.b16 %v629
    %v654 = vpack.c.b16 %v639, %v638
    %v655 = vpack.c.b16 %v641, %v640
    %v656 = vpack.c.b16 %v643, %v642
    %v657 = vpack.c.b16 %v645, %v644
    %v658 = vpack.c.b16 %v647, %v646
    %v659 = vpack.c.b16 %v649, %v648
    %v660 = vpack.c.b16 %v651, %v650
    %v661 = vpack.c.b16 %v653, %v652
    %670 = vst [vmem:[#allocation2] sm:$0xff] %v654
    %671 = vst [vmem:[#allocation2 + $0x8] sm:$0xff] %v655
    %672 = vst [vmem:[#allocation2 + $0x10] sm:$0xff] %v656
    %673 = vst [vmem:[#allocation2 + $0x18] sm:$0xff] %v657
    %674 = vst [vmem:[#allocation2 + $0x20] sm:$0xff] %v658
    %675 = vst [vmem:[#allocation2 + $0x28] sm:$0xff] %v659
    %676 = vst [vmem:[#allocation2 + $0x30] sm:$0xff] %v660
    %677 = vst [vmem:[#allocation2 + $0x38] sm:$0xff] %v661
    // Predicated region
    $region14: #{unembed_forward.1} parent=1 // pred_check
      _
    $region15: #{unembed_forward.1} parent=1 // pred_check_branch
      %679 = sbr.rel (0) target = $region17
    $region16: #{unembed_forward.1} parent=1 // pred_region
      %s681 = ssub.s32 1024, 1024
      %682 = vsyncadd [#allocation3], %s681
      %s683 = sshll.u32 [#allocation2], 4
      %s684 = int_to_ptr.vmem [resolvable:$true] %s683
      %689 = dma.vmem_to_hbm [thread:$0]  %s684, 1024, %s3, [#allocation3], 512, 512, 32
    $region17: #{unembed_forward.1} parent=1 // pred_fallthru
      _
    // Predicated region
    $region18: #{unembed_forward.1} parent=1 // pred_check
      _
    $region19: #{unembed_forward.1} parent=1 // pred_check_branch
      %691 = sbr.rel (0) target = $region21
    $region20: #{unembed_forward.1} parent=1 // pred_region
      %692 = dma.done [#allocation3], 1024
    $region21: #{unembed_forward.1} parent=1 // pred_fallthru
      _
    %693 = vsyncpa [#allocation3], 1

</llo_original>
